<compile_context>
chip_gen: v6e
topology: v6e:2x2x1
jax: 0.10.0
libtpu: 0.0.40
codegen_flags: <defaults>
</compile_context>

<pallas_src>
import functools

import jax
import jax.numpy as jnp
import numpy as np
from jax.experimental import pallas as pl
from jax.experimental.pallas import tpu as pltpu

_VMEM_LIMIT = 32 * 1024 * 1024  # safe on v5e/v6e (128 MiB) and v7x (64 MiB/TC)


# ---------------------------------------------------------------------------
# Kernels
# ---------------------------------------------------------------------------
def _mbstd_stream_kernel(x_ref, out_ref, sums_ref):
    """Process one (G, M, Lt) lane-tile of x.

    - copy the tile through to the C-channel region of the fused output,
    - accumulate sum-over-lanes of the per-group std directly into the
      resident sums output block (f32), initialized at the first lane tile.
    """
    t = pl.program_id(1)

    @pl.when(t == 0)
    def _init():
        sums_ref[...] = jnp.zeros_like(sums_ref)

    tile = x_ref[...]                                    # (G, M, Lt)
    out_ref[...] = tile                                  # fused pass-through copy

    xf = tile.astype(jnp.float32)
    mu = jnp.mean(xf, axis=0, keepdims=True)             # mean over group axis
    diff = xf - mu
    var = jnp.mean(diff * diff, axis=0)                  # (M, Lt) biased variance
    std = jnp.sqrt(var + 1e-8)
    sums_ref[...] += jnp.sum(std, axis=1, keepdims=True)  # (M, 1)


def _stat_lane_epilogue_kernel(y_ref, alias_ref, out_ref):
    """Lane-dense in-place write of the statistic channels (flattened view)."""
    del alias_ref  # aliased with out_ref; untouched channels stay in HBM
    out_ref[...] = jnp.broadcast_to(y_ref[...][None], out_ref.shape).astype(out_ref.dtype)


def _stat_grid4d_epilogue_kernel(y_ref, alias_ref, out_ref):
    """Fallback: broadcast the per-(batch, feature) statistic over (H, W)."""
    del alias_ref
    out_ref[...] = jnp.broadcast_to(y_ref[...], out_ref.shape).astype(out_ref.dtype)


# ---------------------------------------------------------------------------
# Tile-size helpers (host-side, static)
# ---------------------------------------------------------------------------
def _pick_lane_tile(total_lanes, bytes_per_lane, budget=4 << 20, max_lanes=8192):
    """Largest 128-multiple divisor of total_lanes within a per-buffer budget."""
    if total_lanes % 128 != 0:
        return None
    cap = (budget // max(1, bytes_per_lane)) // 128 * 128
    cap = max(128, min(cap, max_lanes, total_lanes))
    for cand in range(cap, 127, -128):
        if total_lanes % cand == 0:
            return cand
    return 128


def _pick_h_tile(H, bytes_per_h_row, budget=2 << 20):
    """Divisor of H (multiple of 8, or H itself) within a modest VMEM budget."""
    if H % 8 != 0 or H * bytes_per_h_row <= budget:
        return H
    best = 8
    for cand in range(8, H + 1, 8):
        if H % cand == 0 and cand * bytes_per_h_row <= budget:
            best = cand
    return best


# ---------------------------------------------------------------------------
# Forward pass
# ---------------------------------------------------------------------------
def minibatch_stddev(x, group_size, num_features, *, lane_tile=None,
                     stat_lane_tile=None, h_tile=None, lane_epilogue=None):
    """Pallas implementation of MiniBatchStdDev.forward (NCHW)."""
    B, C, H, W = x.shape
    G = min(group_size, B)
    assert B % G == 0, "batch must be divisible by group size"
    M = B // G
    F = num_features
    assert C % F == 0, "channels must be divisible by num_features"
    Cp = C // F
    HW = H * W
    lanes_per_group = Cp * HW          # reduction extent per (m, f)
    L_in = C * HW
    L_out = (C + F) * HW
    itemsize = jnp.dtype(x.dtype).itemsize

    Lt = lane_tile if lane_tile is not None else _pick_lane_tile(lanes_per_group, B * itemsize)
    if Lt is None or Lt % 128 != 0 or lanes_per_group % Lt != 0:
        # TODO(synk): fused path needs 128-lane tiles of (C//F)*H*W; fall back to XLA.
        return _reference_impl(x, group_size, num_features)

    tiles_per_f = lanes_per_group // Lt
    P = 2 if tiles_per_f % 2 == 0 else 1       # per-feature-group chunk split (v7x: 2 TCs)
    tiles_per_chunk = tiles_per_f // P
    n_chunks = F * P

    x_r = x.reshape(G, M, L_in)

    out_main, sums = pl.pallas_call(
        _mbstd_stream_kernel,
        grid=(n_chunks, tiles_per_chunk),
        in_specs=[
            pl.BlockSpec((G, M, Lt), lambda ck, t: (0, 0, ck * tiles_per_chunk + t)),
        ],
        out_specs=(
            pl.BlockSpec((G, M, Lt), lambda ck, t: (0, 0, ck * tiles_per_chunk + t)),
            pl.BlockSpec((None, M, 1), lambda ck, t: (ck, 0, 0)),
        ),
        out_shape=(
            jax.ShapeDtypeStruct((G, M, L_out), x.dtype),      # fused output (3-D view)
            jax.ShapeDtypeStruct((n_chunks, M, 1), jnp.float32),
        ),
        compiler_params=pltpu.CompilerParams(
            dimension_semantics=("parallel", "arbitrary"),
            vmem_limit_bytes=_VMEM_LIMIT,
        ),
    )(x_r)

    # Tiny glue: combine per-chunk partial sums -> (M, F) statistic.
    row_sums = sums[:, :, 0]                                     # (F*P, M)
    per_f = row_sums.reshape(F, P, M).sum(axis=1)                # (F, M)
    stat = (per_f.T * (1.0 / lanes_per_group)).astype(x.dtype)   # (M, F)

    # ---------------- Epilogue: fill the F statistic channels in place --------
    use_lane = lane_epilogue if lane_epilogue is not None else ((F * HW) % 128 == 0)
    Lst = stat_lane_tile
    if use_lane:
        if Lst is None:
            Lst = _pick_lane_tile(F * HW, B * itemsize)
        if Lst is None or Lst % 128 != 0 or (F * HW) % Lst != 0:
            use_lane = False

    if use_lane:
        # Lane-dense path: write (G, M, Lst) blocks of the flattened output.
        n_st = (F * HW) // Lst
        c_blocks = L_in // Lst            # Lst | F*HW and F | C  =>  Lst | C*HW
        stat_l = jnp.broadcast_to(stat[:, :, None], (M, F, HW)).reshape(M, F * HW)
        out3 = pl.pallas_call(
            _stat_lane_epilogue_kernel,
            grid=(n_st,),
            in_specs=[
                pl.BlockSpec((M, Lst), lambda s: (0, s)),
                pl.BlockSpec((G, M, Lst), lambda s: (0, 0, c_blocks + s)),
            ],
            out_specs=pl.BlockSpec((G, M, Lst), lambda s: (0, 0, c_blocks + s)),
            out_shape=jax.ShapeDtypeStruct((G, M, L_out), x.dtype),
            input_output_aliases={1: 0},   # update only the stat lanes in place
            compiler_params=pltpu.CompilerParams(
                dimension_semantics=("parallel",),
                vmem_limit_bytes=_VMEM_LIMIT,
            ),
        )(stat_l, out_main)
        return out3.reshape(B, C + F, H, W)

    # Fallback path: (H, W)-tiled write on the 4-D view (always legal).
    y4 = jnp.tile(stat, (G, 1)).reshape(B, F, 1, 1)              # batch b -> stat[b % M]
    out4 = out_main.reshape(B, C + F, H, W)
    if h_tile is None or H % h_tile != 0 or (h_tile % 8 != 0 and h_tile != H):
        h_tile = _pick_h_tile(H, B * F * W * itemsize)
    n_h = H // h_tile

    out = pl.pallas_call(
        _stat_grid4d_epilogue_kernel,
        grid=(n_h,),
        in_specs=[
            pl.BlockSpec((B, F, 1, 1), lambda h: (0, 0, 0, 0)),
            pl.BlockSpec((B, F, h_tile, W), lambda h: (0, Cp, h, 0)),
        ],
        out_specs=pl.BlockSpec((B, F, h_tile, W), lambda h: (0, Cp, h, 0)),
        out_shape=jax.ShapeDtypeStruct((B, C + F, H, W), x.dtype),
        input_output_aliases={1: 0},       # update only the F stat channels in place
        compiler_params=pltpu.CompilerParams(
            dimension_semantics=("parallel",),
            vmem_limit_bytes=_VMEM_LIMIT,
        ),
    )(y4, out4)
    return out


# ---------------------------------------------------------------------------
# Pure-JAX reference (verification + fallback for non-128-aligned shapes)
# ---------------------------------------------------------------------------
def _reference_impl(x, group_size, num_features):
    B, C, H, W = x.shape
    G = min(group_size, B)
    F = num_features
    y = x.reshape(G, -1, F, C // F, H, W)
    y = y - jnp.mean(y, axis=0, keepdims=True)
    y = jnp.mean(y * y, axis=0)
    y = jnp.sqrt(y + 1e-8)
    y = jnp.mean(y, axis=(2, 3, 4), keepdims=True)    # (M, F, 1, 1, 1)
    y = jnp.mean(y, axis=2)                           # (M, F, 1, 1)
    y = jnp.tile(y, (G, 1, H, W))                     # (B, F, H, W)
    return jnp.concatenate([x, y.astype(x.dtype)], axis=1)


if __name__ == "__main__":
    group_size = 2
    num_features = 2
    B, C, H, W = 4, 4, 16, 16

    key = jax.random.PRNGKey(0)
    x = jax.random.normal(key, (B, C, H, W), dtype=jnp.float32)

    ref = jax.block_until_ready(_reference_impl(x, group_size, num_features))

    # 1) Auto-picked tiles (one lane tile per feature group, lane-dense epilogue).
    fwd = jax.jit(functools.partial(
        minibatch_stddev, group_size=group_size, num_features=num_features))
    out = jax.block_until_ready(fwd(x))

    # 2) Forced small tiles: multi-tile accumulation, parallel chunk split and a
    #    multi-tile lane-dense epilogue.
    fwd_tiled = jax.jit(functools.partial(
        minibatch_stddev, group_size=group_size, num_features=num_features,
        lane_tile=128, stat_lane_tile=128))
    out_tiled = jax.block_until_ready(fwd_tiled(x))

    # 3) Forced (H, W)-tiled 4-D epilogue fallback path.
    fwd_4d = jax.jit(functools.partial(
        minibatch_stddev, group_size=group_size, num_features=num_features,
        lane_epilogue=False, h_tile=8))
    out_4d = jax.block_until_ready(fwd_4d(x))

    assert out.shape == (B, C + num_features, H, W), out.shape
    for got in (out, out_tiled, out_4d):
        np.testing.assert_allclose(np.asarray(got), np.asarray(ref), rtol=1e-5, atol=1e-5)

    print("KERNEL_OK")
</pallas_src>

<mosaic_0001>
module attributes {stable_mosaic.version = 11 : i64} {
  func.func @_mbstd_stream_kernel(%arg0: i32, %arg1: i32, %arg2: memref<2x2x512xf32, #tpu.memory_space<vmem>>, %arg3: memref<2x2x512xf32, #tpu.memory_space<vmem>>, %arg4: memref<1x2x1xf32, #tpu.memory_space<vmem>>) attributes {dimension_semantics = [#tpu.dimension_semantics<parallel>, #tpu.dimension_semantics<arbitrary>], iteration_bounds = array<i64: 2, 1>, scalar_prefetch = 0 : i64, scratch_operands = 0 : i64, tpu.core_type = #tpu.core_type<tc>, window_params = [{transform_indices = @transform_0, window_bounds = array<i64: 2, 2, 512>}, {transform_indices = @transform_1, window_bounds = array<i64: 2, 2, 512>}, {transform_indices = @transform_2, window_bounds = array<i64: 1, 2, 1>}]} {
    %c0_i32 = arith.constant 0 : i32
    %0 = arith.cmpi eq, %arg1, %c0_i32 : i32
    %1 = arith.extui %0 : i1 to i32
    %c0_i32_0 = arith.constant 0 : i32
    %2 = arith.cmpi ne, %1, %c0_i32_0 : i32
    scf.if %2 {
      %cst_17 = arith.constant 0.000000e+00 : f32
      %26 = vector.broadcast %cst_17 : f32 to vector<2x1xf32>
      %c0_18 = arith.constant 0 : index
      %c0_19 = arith.constant 0 : index
      %c0_20 = arith.constant 0 : index
      %27 = vector.load %arg4[%c0_18, %c0_19, %c0_20] : memref<1x2x1xf32, #tpu.memory_space<vmem>>, vector<1x2x1xf32>
      %28 = vector.shape_cast %27 : vector<1x2x1xf32> to vector<2x1xf32>
      %29 = vector.shape_cast %26 : vector<2x1xf32> to vector<1x2x1xf32>
      tpu.vector_store %arg4[%c0_18, %c0_19, %c0_20], %29 {strides = array<i32>} : memref<1x2x1xf32, #tpu.memory_space<vmem>>, vector<1x2x1xf32>,
    } else {
    }
    %c0 = arith.constant 0 : index
    %c0_1 = arith.constant 0 : index
    %c0_2 = arith.constant 0 : index
    %3 = vector.load %arg2[%c0, %c0_1, %c0_2] : memref<2x2x512xf32, #tpu.memory_space<vmem>>, vector<2x2x512xf32>
    %c0_3 = arith.constant 0 : index
    %c0_4 = arith.constant 0 : index
    %c0_5 = arith.constant 0 : index
    %4 = vector.load %arg3[%c0_3, %c0_4, %c0_5] : memref<2x2x512xf32, #tpu.memory_space<vmem>>, vector<2x2x512xf32>
    tpu.vector_store %arg3[%c0_3, %c0_4, %c0_5], %3 {strides = array<i32>} : memref<2x2x512xf32, #tpu.memory_space<vmem>>, vector<2x2x512xf32>,
    %cst = arith.constant dense<0.000000e+00> : vector<2x512xf32>
    %5 = vector.multi_reduction <add>, %3, %cst [0] : vector<2x2x512xf32> to vector<2x512xf32>
    %6 = vector.shape_cast %5 : vector<2x512xf32> to vector<1x2x512xf32>
    %cst_6 = arith.constant 2.000000e+00 : f32
    %7 = vector.broadcast %cst_6 : f32 to vector<1x2x512xf32>
    %8 = arith.divf %6, %7 : vector<1x2x512xf32>
    %9 = vector.broadcast %8 : vector<1x2x512xf32> to vector<2x2x512xf32>
    %10 = arith.subf %3, %9 : vector<2x2x512xf32>
    %11 = arith.mulf %10, %10 : vector<2x2x512xf32>
    %cst_7 = arith.constant dense<0.000000e+00> : vector<2x512xf32>
    %12 = vector.multi_reduction <add>, %11, %cst_7 [0] : vector<2x2x512xf32> to vector<2x512xf32>
    %cst_8 = arith.constant 2.000000e+00 : f32
    %13 = vector.broadcast %cst_8 : f32 to vector<2x512xf32>
    %14 = arith.divf %12, %13 : vector<2x512xf32>
    %cst_9 = arith.constant 9.99999993E-9 : f32
    %15 = vector.broadcast %cst_9 : f32 to vector<2x512xf32>
    %16 = arith.addf %14, %15 : vector<2x512xf32>
    %17 = math.sqrt %16 : vector<2x512xf32>
    %c0_10 = arith.constant 0 : index
    %c0_11 = arith.constant 0 : index
    %c0_12 = arith.constant 0 : index
    %18 = vector.load %arg4[%c0_10, %c0_11, %c0_12] : memref<1x2x1xf32, #tpu.memory_space<vmem>>, vector<1x2x1xf32>
    %19 = vector.shape_cast %18 : vector<1x2x1xf32> to vector<2x1xf32>
    %cst_13 = arith.constant dense<0.000000e+00> : vector<2xf32>
    %20 = vector.multi_reduction <add>, %17, %cst_13 [1] : vector<2x512xf32> to vector<2xf32>
    %21 = vector.shape_cast %20 : vector<2xf32> to vector<2x1xf32>
    %22 = arith.addf %19, %21 : vector<2x1xf32>
    %c0_14 = arith.constant 0 : index
    %c0_15 = arith.constant 0 : index
    %c0_16 = arith.constant 0 : index
    %23 = vector.load %arg4[%c0_14, %c0_15, %c0_16] : memref<1x2x1xf32, #tpu.memory_space<vmem>>, vector<1x2x1xf32>
    %24 = vector.shape_cast %23 : vector<1x2x1xf32> to vector<2x1xf32>
    %25 = vector.shape_cast %22 : vector<2x1xf32> to vector<1x2x1xf32>
    tpu.vector_store %arg4[%c0_14, %c0_15, %c0_16], %25 {strides = array<i32>} : memref<1x2x1xf32, #tpu.memory_space<vmem>>, vector<1x2x1xf32>,
    return
  }
  func.func @transform_0(%arg0: i32, %arg1: i32) -> (i32, i32, i32) {
    %c1_i32 = arith.constant 1 : i32
    %0 = arith.muli %arg0, %c1_i32 : i32
    %1 = arith.addi %0, %arg1 : i32
    %c0_i32 = arith.constant 0 : i32
    %c0_i32_0 = arith.constant 0 : i32
    %c0_i32_1 = arith.constant 0 : i32
    return %c0_i32, %c0_i32_0, %1 : i32, i32, i32
  }
  func.func @transform_1(%arg0: i32, %arg1: i32) -> (i32, i32, i32) {
    %c1_i32 = arith.constant 1 : i32
    %0 = arith.muli %arg0, %c1_i32 : i32
    %1 = arith.addi %0, %arg1 : i32
    %c0_i32 = arith.constant 0 : i32
    %c0_i32_0 = arith.constant 0 : i32
    %c0_i32_1 = arith.constant 0 : i32
    return %c0_i32, %c0_i32_0, %1 : i32, i32, i32
  }
  func.func @transform_2(%arg0: i32, %arg1: i32) -> (i32, i32, i32) {
    %c0_i32 = arith.constant 0 : i32
    %c0_i32_0 = arith.constant 0 : i32
    %c0_i32_1 = arith.constant 0 : i32
    return %arg0, %c0_i32, %c0_i32_0 : i32, i32, i32
  }
}

module attributes {stable_mosaic.version = 11 : i64} {
  func.func @_stat_lane_epilogue_kernel(%arg0: i32, %arg1: memref<2x512xf32, #tpu.memory_space<vmem>>, %arg2: memref<2x2x512xf32, #tpu.memory_space<vmem>>, %arg3: memref<2x2x512xf32, #tpu.memory_space<vmem>>) attributes {dimension_semantics = [#tpu.dimension_semantics<parallel>], iteration_bounds = array<i64: 1>, scalar_prefetch = 0 : i64, scratch_operands = 0 : i64, tpu.core_type = #tpu.core_type<tc>, window_params = [{transform_indices = @transform_0, window_bounds = array<i64: 2, 512>}, {transform_indices = @transform_1, window_bounds = array<i64: 2, 2, 512>}, {transform_indices = @transform_2, window_bounds = array<i64: 2, 2, 512>}]} {
    %c0 = arith.constant 0 : index
    %c0_0 = arith.constant 0 : index
    %0 = vector.load %arg1[%c0, %c0_0] : memref<2x512xf32, #tpu.memory_space<vmem>>, vector<2x512xf32>
    %1 = vector.shape_cast %0 : vector<2x512xf32> to vector<1x2x512xf32>
    %2 = vector.shape_cast %1 : vector<1x2x512xf32> to vector<1x2x512xf32>
    %3 = vector.broadcast %2 : vector<1x2x512xf32> to vector<2x2x512xf32>
    %c0_1 = arith.constant 0 : index
    %c0_2 = arith.constant 0 : index
    %c0_3 = arith.constant 0 : index
    %4 = vector.load %arg3[%c0_1, %c0_2, %c0_3] : memref<2x2x512xf32, #tpu.memory_space<vmem>>, vector<2x2x512xf32>
    tpu.vector_store %arg3[%c0_1, %c0_2, %c0_3], %3 {strides = array<i32>} : memref<2x2x512xf32, #tpu.memory_space<vmem>>, vector<2x2x512xf32>,
    return
  }
  func.func @transform_0(%arg0: i32) -> (i32, i32) {
    %c0_i32 = arith.constant 0 : i32
    %c0_i32_0 = arith.constant 0 : i32
    return %c0_i32, %arg0 : i32, i32
  }
  func.func @transform_1(%arg0: i32) -> (i32, i32, i32) {
    %c2_i32 = arith.constant 2 : i32
    %0 = arith.addi %c2_i32, %arg0 : i32
    %c0_i32 = arith.constant 0 : i32
    %c0_i32_0 = arith.constant 0 : i32
    %c0_i32_1 = arith.constant 0 : i32
    return %c0_i32, %c0_i32_0, %0 : i32, i32, i32
  }
  func.func @transform_2(%arg0: i32) -> (i32, i32, i32) {
    %c2_i32 = arith.constant 2 : i32
    %0 = arith.addi %c2_i32, %arg0 : i32
    %c0_i32 = arith.constant 0 : i32
    %c0_i32_0 = arith.constant 0 : i32
    %c0_i32_1 = arith.constant 0 : i32
    return %c0_i32, %c0_i32_0, %0 : i32, i32, i32
  }
}

</mosaic_0001>

<llo_original>
// kernel: minibatch_stddev.3
$region0: #{minibatch_stddev.3}
  #allocation0 [shape = 'u32[]', space=smem, size = 0x4, offset = 0x4, fixed_abs, tag = 'smem constant byte address 0x4 - core index']
  #allocation1 [shape = 'u32[144,128]{1,0:T(1,128)}', space=vmem, size = 0x12000, scoped, tag = 'internal scratch']
  %s0 = inlined_call_operand.vmem [shape: f32[2,512], index: 0, kind: input, shape index: {}]
  %s1 = inlined_call_operand.vmem [shape: f32[2,2,1536], index: 1, kind: input, shape index: {}, may-alias: {1,2}]
  %s2 = inlined_call_operand.vmem [shape: f32[2,2,1536], index: 2, kind: output, shape index: {}, may-alias: {1,2}]
  %s3 = sld [smem:[#allocation0]]
  $region90: #{minibatch_stddev.3} parent=0
    _
  %s5 = ssub.s32 1, %s3
  %s6 = scalar_select 0, %s5, %s3
  $region1: #{minibatch_stddev.3} parent=0
    #allocation2 [shape = 'u8[8192]{0}', space=vmem, size = 0x2000, scoped, tag = 'input window, operand 1, single buffered']
    #allocation3 [shape = 'u8[8192]{0}', space=vmem, size = 0x2000, scoped, tag = 'output window, operand 0, single buffered']
    // Predicated region
    $region2: #{minibatch_stddev.3} parent=1 // pred_check
      _
    $region3: #{minibatch_stddev.3} parent=1 // pred_check_branch
      %8 = sbr.rel (0) target = $region5
    $region4: #{minibatch_stddev.3} parent=1 // pred_region
      _
    $region5: #{minibatch_stddev.3} parent=1 // pred_fallthru
      _
    // Predicated region
    $region6: #{minibatch_stddev.3} parent=1 // pred_check
      _
    $region7: #{minibatch_stddev.3} parent=1 // pred_check_branch
      %10 = sbr.rel (0) target = $region9
    $region8: #{minibatch_stddev.3} parent=1 // pred_region
      %s11 = sadd.s32 0, 2
      %s12 = smul.u32 4, %s11
      %s13 = smul.addr %s12, 2
      %s14 = scalar_lea.vmem %s1, %s13
      // Predicated region
      $region10: #{minibatch_stddev.3} parent=8 // pred_check
        _
      $region11: #{minibatch_stddev.3} parent=8 // pred_check_branch
        %16 = sbr.rel (0) target = $region13
      $region12: #{minibatch_stddev.3} parent=8 // pred_region
        // Predicated region
        $region14: #{minibatch_stddev.3} parent=12 // pred_check
          _
        $region15: #{minibatch_stddev.3} parent=12 // pred_check_branch
          %18 = sbr.rel (0) target = $region17
        $region16: #{minibatch_stddev.3} parent=12 // pred_region
          // Predicated region
          $region29: #{minibatch_stddev.3} parent=16 // pred_check
            _
          $region30: #{minibatch_stddev.3} parent=16 // pred_check_branch
            %36 = sbr.rel (0) target = $region32
          $region31: #{minibatch_stddev.3} parent=16 // pred_region
            loop: start=0, step=1, limit=1
            $region33: #{minibatch_stddev.3} parent=31 // loop_pre_header
              _
            $region34: #{minibatch_stddev.3} parent=31 // loop_header
              %s38 = sphi 0, %s42
              %p39 = scmp.ge.s32.totalorder %s38, 1
              %s43 = sphi %s14, %s14
              %s44 = sphi [#allocation2], [#allocation2]
            $region35: #{minibatch_stddev.3} parent=31 // loop_header_branch
              %41 = sbr.rel (%p39) target = $region39
            $region36: #{minibatch_stddev.3} parent=31 // loop_body
              %v45 = vld [vmem:[%s43] sm:$0xff]
              %46 = vst [vmem:[%s44] sm:$0xff] %v45
              %v47 = vld [vmem:[%s43 + $0x18] sm:$0xff]
              %48 = vst [vmem:[%s44 + $0x8] sm:$0xff] %v47
            $region37: #{minibatch_stddev.3} parent=31 // loop_footer
              %s42 = sadd.s32 1, %s38
            $region38: #{minibatch_stddev.3} parent=31 // loop_footer_branch
              %37 = sbr.rel target = $region34
            $region39: #{minibatch_stddev.3} parent=31 // loop_exit
              _
          $region32: #{minibatch_stddev.3} parent=16 // pred_fallthru
            _
          // Predicated region
          $region40: #{minibatch_stddev.3} parent=16 // pred_check
            _
          $region41: #{minibatch_stddev.3} parent=16 // pred_check_branch
            %50 = sbr.rel target = $region43
          $region42: #{minibatch_stddev.3} parent=16 // pred_region
            _
          $region43: #{minibatch_stddev.3} parent=16 // pred_fallthru
            _
        $region17: #{minibatch_stddev.3} parent=12 // pred_fallthru
          _
        // Predicated region
        $region18: #{minibatch_stddev.3} parent=12 // pred_check
          _
        $region19: #{minibatch_stddev.3} parent=12 // pred_check_branch
          %20 = sbr.rel target = $region21
        $region20: #{minibatch_stddev.3} parent=12 // pred_region
          %s22 = ssub.s32 256, 1
          loop: start=0, step=1, limit=1
          $region22: #{minibatch_stddev.3} parent=20 // loop_pre_header
            _
          $region23: #{minibatch_stddev.3} parent=20 // loop_header
            %s24 = sphi 0, %s28
            %p25 = scmp.ge.s32.totalorder %s24, 1
            %s29 = sphi %s14, %s14
            %s30 = sphi [#allocation2], [#allocation2]
          $region24: #{minibatch_stddev.3} parent=20 // loop_header_branch
            %27 = sbr.rel (%p25) target = $region28
          $region25: #{minibatch_stddev.3} parent=20 // loop_body
            %v31 = vld [vmem:[%s29] sm:%s22]
            %32 = vst [vmem:[%s30] sm:%s22] %v31
            %v33 = vld [vmem:[%s29 + $0x18] sm:%s22]
            %34 = vst [vmem:[%s30 + $0x8] sm:%s22] %v33
          $region26: #{minibatch_stddev.3} parent=20 // loop_footer
            %s28 = sadd.s32 1, %s24
          $region27: #{minibatch_stddev.3} parent=20 // loop_footer_branch
            %23 = sbr.rel target = $region23
          $region28: #{minibatch_stddev.3} parent=20 // loop_exit
            _
        $region21: #{minibatch_stddev.3} parent=12 // pred_fallthru
          _
      $region13: #{minibatch_stddev.3} parent=8 // pred_fallthru
        _
      %51 = vnop
    $region9: #{minibatch_stddev.3} parent=1 // pred_fallthru
      _
    // Predicated region
    $region44: #{minibatch_stddev.3} parent=1 // pred_check
      _
    $region45: #{minibatch_stddev.3} parent=1 // pred_check_branch
      %53 = sbr.rel (0) target = $region47
    $region46: #{minibatch_stddev.3} parent=1 // pred_region
      _
    $region47: #{minibatch_stddev.3} parent=1 // pred_fallthru
      _
    %s54 = sadd.s32 0, 2
    %s55 = smul.u32 4, %s54
    %s56 = sadd.s32 0, 2
    %s57 = smul.u32 4, %s56
    %v58 = vld [vmem:[%s0] sm:$0xff]
    %59 = vst [vmem:[#allocation3] sm:$0xff] %v58
    %60 = vst [vmem:[#allocation3 + $0x8] sm:$0xff] %v58
    // Predicated region
    $region48: #{minibatch_stddev.3} parent=1 // pred_check
      _
    $region49: #{minibatch_stddev.3} parent=1 // pred_check_branch
      %62 = sbr.rel (0) target = $region51
    $region50: #{minibatch_stddev.3} parent=1 // pred_region
      %s63 = sadd.s32 0, 2
      %s64 = smul.u32 4, %s63
      %s65 = smul.addr %s64, 2
      %s66 = scalar_lea.vmem %s2, %s65
      // Predicated region
      $region52: #{minibatch_stddev.3} parent=50 // pred_check
        _
      $region53: #{minibatch_stddev.3} parent=50 // pred_check_branch
        %68 = sbr.rel (0) target = $region55
      $region54: #{minibatch_stddev.3} parent=50 // pred_region
        // Predicated region
        $region56: #{minibatch_stddev.3} parent=54 // pred_check
          _
        $region57: #{minibatch_stddev.3} parent=54 // pred_check_branch
          %70 = sbr.rel (0) target = $region59
        $region58: #{minibatch_stddev.3} parent=54 // pred_region
          // Predicated region
          $region71: #{minibatch_stddev.3} parent=58 // pred_check
            _
          $region72: #{minibatch_stddev.3} parent=58 // pred_check_branch
            %88 = sbr.rel (0) target = $region74
          $region73: #{minibatch_stddev.3} parent=58 // pred_region
            loop: start=0, step=1, limit=1
            $region75: #{minibatch_stddev.3} parent=73 // loop_pre_header
              _
            $region76: #{minibatch_stddev.3} parent=73 // loop_header
              %s90 = sphi 0, %s94
              %p91 = scmp.ge.s32.totalorder %s90, 1
              %s95 = sphi [#allocation3], [#allocation3]
              %s96 = sphi %s66, %s66
            $region77: #{minibatch_stddev.3} parent=73 // loop_header_branch
              %93 = sbr.rel (%p91) target = $region81
            $region78: #{minibatch_stddev.3} parent=73 // loop_body
              %v97 = vld [vmem:[%s95] sm:$0xff]
              %98 = vst [vmem:[%s96] sm:$0xff] %v97
              %v99 = vld [vmem:[%s95 + $0x8] sm:$0xff]
              %100 = vst [vmem:[%s96 + $0x18] sm:$0xff] %v99
            $region79: #{minibatch_stddev.3} parent=73 // loop_footer
              %s94 = sadd.s32 1, %s90
            $region80: #{minibatch_stddev.3} parent=73 // loop_footer_branch
              %89 = sbr.rel target = $region76
            $region81: #{minibatch_stddev.3} parent=73 // loop_exit
              _
          $region74: #{minibatch_stddev.3} parent=58 // pred_fallthru
            _
          // Predicated region
          $region82: #{minibatch_stddev.3} parent=58 // pred_check
            _
          $region83: #{minibatch_stddev.3} parent=58 // pred_check_branch
            %102 = sbr.rel target = $region85
          $region84: #{minibatch_stddev.3} parent=58 // pred_region
            _
          $region85: #{minibatch_stddev.3} parent=58 // pred_fallthru
            _
        $region59: #{minibatch_stddev.3} parent=54 // pred_fallthru
          _
        // Predicated region
        $region60: #{minibatch_stddev.3} parent=54 // pred_check
          _
        $region61: #{minibatch_stddev.3} parent=54 // pred_check_branch
          %72 = sbr.rel target = $region63
        $region62: #{minibatch_stddev.3} parent=54 // pred_region
          %s74 = ssub.s32 256, 1
          loop: start=0, step=1, limit=1
          $region64: #{minibatch_stddev.3} parent=62 // loop_pre_header
            _
          $region65: #{minibatch_stddev.3} parent=62 // loop_header
            %s76 = sphi 0, %s80
            %p77 = scmp.ge.s32.totalorder %s76, 1
            %s81 = sphi [#allocation3], [#allocation3]
            %s82 = sphi %s66, %s66
          $region66: #{minibatch_stddev.3} parent=62 // loop_header_branch
            %79 = sbr.rel (%p77) target = $region70
          $region67: #{minibatch_stddev.3} parent=62 // loop_body
            %v83 = vld [vmem:[%s81] sm:%s74]
            %84 = vst [vmem:[%s82] sm:%s74] %v83
            %v85 = vld [vmem:[%s81 + $0x8] sm:%s74]
            %86 = vst [vmem:[%s82 + $0x18] sm:%s74] %v85
          $region68: #{minibatch_stddev.3} parent=62 // loop_footer
            %s80 = sadd.s32 1, %s76
          $region69: #{minibatch_stddev.3} parent=62 // loop_footer_branch
            %75 = sbr.rel target = $region65
          $region70: #{minibatch_stddev.3} parent=62 // loop_exit
            _
        $region63: #{minibatch_stddev.3} parent=54 // pred_fallthru
          _
      $region55: #{minibatch_stddev.3} parent=50 // pred_fallthru
        _
      %103 = vnop
    $region51: #{minibatch_stddev.3} parent=1 // pred_fallthru
      _
    // Predicated region
    $region86: #{minibatch_stddev.3} parent=1 // pred_check
      _
    $region87: #{minibatch_stddev.3} parent=1 // pred_check_branch
      %105 = sbr.rel (0) target = $region89
    $region88: #{minibatch_stddev.3} parent=1 // pred_region
      _
    $region89: #{minibatch_stddev.3} parent=1 // pred_fallthru
      _

// kernel: minibatch_stddev.2
$region0: #{minibatch_stddev.2}
  #allocation0 [shape = 'u32[]', space=smem, size = 0x4, offset = 0x4, fixed_abs, tag = 'smem constant byte address 0x4 - core index']
  #allocation1 [shape = 'u32[144,128]{1,0:T(1,128)}', space=vmem, size = 0x12000, scoped, tag = 'internal scratch']
  %s0 = inlined_call_operand.vmem [shape: f32[2,2,1024], index: 0, kind: input, shape index: {}]
  %s1 = inlined_call_operand.vmem [shape: f32[2,2,1536], index: 1, kind: output, shape index: {0}]
  %s2 = inlined_call_operand.vmem [shape: f32[2,2,1], index: 2, kind: output, shape index: {1}]
  %3 = xla_tuple %s1, %s2
  %s4 = sld [smem:[#allocation0]]
  $region121: #{minibatch_stddev.2} parent=0
    _
  %s6 = ssub.s32 1, %s4
  %s7 = scalar_select 0, %s6, %s4
  $region1: #{minibatch_stddev.2} parent=0
    #allocation2 [shape = 'u8[16384]{0}', space=vmem, size = 0x4000, scoped, tag = 'input window, operand 0']
    #allocation3 [shape = 'u8[16384]{0}', space=vmem, size = 0x4000, scoped, tag = 'output window, operand 0']
    loop: start=0, step=1, limit=4
    $region2: #{minibatch_stddev.2} parent=1 // loop_pre_header
      _
    $region3: #{minibatch_stddev.2} parent=1 // loop_header
      %s9 = sphi 0, %s13
      %p10 = scmp.ge.s32.totalorder %s9, 4
      %s16 = sphi 0, %s28
      %s17 = sphi 0, %s24
      %s18 = sphi 0, %s16
      %s19 = sphi 0, %s17
      %s20 = sphi 0, %s18
      %s21 = sphi 0, %s19
      %s33 = sphi 0, %s35
      %s36 = sphi 0, %s33
      %s37 = sphi 0, %s36
      %s53 = sphi 0, %s37
      %s61 = sphi 0, %s63
      %s64 = sphi 0, %s61
      %s65 = sphi 0, %s64
      %s81 = sphi 0, %s65
      %s87 = sphi 0, %s89
      %s90 = sphi 0, %s87
      %s91 = sphi 0, %s90
      %s107 = sphi 0, %s91
    $region4: #{minibatch_stddev.2} parent=1 // loop_header_branch
      %12 = sbr.rel (%p10) target = $region8
    $region5: #{minibatch_stddev.2} parent=1 // loop_body
      %s14 = ssub.s32 %s9, 1
      %s15 = ssub.s32 %s9, 2
      %s22 = sadd.s32 1, %s17
      %p23 = scmp.ge.s32.totalorder %s22, 1
      %s24 = scalar_select %p23, 0, %s22
      %s25 = sadd.s32 1, %s16
      %s26 = scalar_select %p23, %s25, %s16
      %p27 = scmp.ge.s32.totalorder %s26, 2
      %s28 = scalar_select %p27, 0, %s26
      %s29 = sadd.s32 %s16, %s17
      %s30 = sadd.s32 %s28, %s24
      %s31 = ssub.s32 %s29, %s30
      %p32 = scmp.eq.s32.totalorder %s31, 0
      %s34 = sadd.s32 %s33, 1
      %s35 = scalar_select %p32, %s33, %s34
      %p38 = pneg %p32
      %p39 = scmp.eq.s32.totalorder %s9, 1
      %p40 = por %p38, %p39
      %p41 = scmp.ne.s32.totalorder %s33, %s36
      %p42 = scmp.eq.s32.totalorder %s9, 0
      %p43 = por %p41, %p42
      %p44 = scmp.ne.s32.totalorder %s33, %s36
      %p45 = scmp.eq.s32.totalorder %s14, 1
      %p46 = por %p44, %p45
      %p47 = scmp.ne.s32.totalorder %s36, %s37
      %p48 = scmp.eq.s32.totalorder %s14, 0
      %p49 = por %p47, %p48
      %p50 = scmp.ne.s32.totalorder %s36, %s37
      %p51 = scmp.eq.s32.totalorder %s15, 1
      %p52 = por %p50, %p51
      %p54 = scmp.ne.s32.totalorder %s37, %s53
      %p55 = scmp.eq.s32.totalorder %s15, 0
      %p56 = por %p54, %p55
      %s57 = sadd.s32 %s16, %s17
      %s58 = sadd.s32 %s28, %s24
      %s59 = ssub.s32 %s57, %s58
      %p60 = scmp.eq.s32.totalorder %s59, 0
      %s62 = sadd.s32 %s61, 1
      %s63 = scalar_select %p60, %s61, %s62
      %p66 = pneg %p60
      %p67 = scmp.eq.s32.totalorder %s9, 1
      %p68 = por %p66, %p67
      %p69 = scmp.ne.s32.totalorder %s61, %s64
      %p70 = scmp.eq.s32.totalorder %s9, 0
      %p71 = por %p69, %p70
      %p72 = scmp.ne.s32.totalorder %s61, %s64
      %p73 = scmp.eq.s32.totalorder %s14, 1
      %p74 = por %p72, %p73
      %p75 = scmp.ne.s32.totalorder %s64, %s65
      %p76 = scmp.eq.s32.totalorder %s14, 0
      %p77 = por %p75, %p76
      %p78 = scmp.ne.s32.totalorder %s64, %s65
      %p79 = scmp.eq.s32.totalorder %s15, 1
      %p80 = por %p78, %p79
      %p82 = scmp.ne.s32.totalorder %s65, %s81
      %p83 = scmp.eq.s32.totalorder %s15, 0
      %p84 = por %p82, %p83
      %s85 = ssub.s32 %s16, %s28
      %p86 = scmp.eq.s32.totalorder %s85, 0
      %s88 = sadd.s32 %s87, 1
      %s89 = scalar_select %p86, %s87, %s88
      %p92 = pneg %p86
      %p93 = scmp.eq.s32.totalorder %s9, 1
      %p94 = por %p92, %p93
      %p95 = scmp.ne.s32.totalorder %s87, %s90
      %p96 = scmp.eq.s32.totalorder %s9, 0
      %p97 = por %p95, %p96
      %p98 = scmp.ne.s32.totalorder %s87, %s90
      %p99 = scmp.eq.s32.totalorder %s14, 1
      %p100 = por %p98, %p99
      %p101 = scmp.ne.s32.totalorder %s90, %s91
      %p102 = scmp.eq.s32.totalorder %s14, 0
      %p103 = por %p101, %p102
      %p104 = scmp.ne.s32.totalorder %s90, %s91
      %p105 = scmp.eq.s32.totalorder %s15, 1
      %p106 = por %p104, %p105
      %p108 = scmp.ne.s32.totalorder %s91, %s107
      %p109 = scmp.eq.s32.totalorder %s15, 0
      %p110 = por %p108, %p109
      %p111 = scmp.le.s32.totalorder 1, %s9
      %p112 = scmp.lt.s32.totalorder %s9, 3
      %p113 = pnand %p111, %p112
      %p114 = pneg %p113
      // Predicated region
      $region9: #{minibatch_stddev.2} parent=5 // pred_check
        _
      $region10: #{minibatch_stddev.2} parent=5 // pred_check_branch
        %116 = sbr.rel (%p113) target = $region12
      $region11: #{minibatch_stddev.2} parent=5 // pred_region
        %s117 = ssub.s32 %s9, 1
      $region12: #{minibatch_stddev.2} parent=5 // pred_fallthru
        _
      %p118 = scmp.lt.s32.totalorder %s9, 2
      // Predicated region
      $region13: #{minibatch_stddev.2} parent=5 // pred_check
        %p119 = pneg %p118
      $region14: #{minibatch_stddev.2} parent=5 // pred_check_branch
        %121 = sbr.rel (%p119) target = $region16
      $region15: #{minibatch_stddev.2} parent=5 // pred_region
        // Predicated region
        $region17: #{minibatch_stddev.2} parent=15 // pred_check
          %p122 = pneg %p43
        $region18: #{minibatch_stddev.2} parent=15 // pred_check_branch
          %124 = sbr.rel (%p122) target = $region20
        $region19: #{minibatch_stddev.2} parent=15 // pred_region
          %s125 = sand.u32 %s33, 1
          %s126 = sand.u32 %s33, 1
          %s127 = smul.addr %s126, 16
          %s128 = scalar_lea.vmem [#allocation2], %s127
          %s129 = sadd.s32 %s16, %s17
          %s130 = smul.u32 4, %s129
          %s131 = smul.addr %s130, 2
          %s132 = scalar_lea.vmem %s0, %s131
          // Predicated region
          $region21: #{minibatch_stddev.2} parent=19 // pred_check
            _
          $region22: #{minibatch_stddev.2} parent=19 // pred_check_branch
            %134 = sbr.rel (0) target = $region24
          $region23: #{minibatch_stddev.2} parent=19 // pred_region
            // Predicated region
            $region25: #{minibatch_stddev.2} parent=23 // pred_check
              _
            $region26: #{minibatch_stddev.2} parent=23 // pred_check_branch
              %136 = sbr.rel (0) target = $region28
            $region27: #{minibatch_stddev.2} parent=23 // pred_region
              // Predicated region
              $region40: #{minibatch_stddev.2} parent=27 // pred_check
                _
              $region41: #{minibatch_stddev.2} parent=27 // pred_check_branch
                %154 = sbr.rel (0) target = $region43
              $region42: #{minibatch_stddev.2} parent=27 // pred_region
                loop: start=0, step=1, limit=1
                $region44: #{minibatch_stddev.2} parent=42 // loop_pre_header
                  _
                $region45: #{minibatch_stddev.2} parent=42 // loop_header
                  %s156 = sphi 0, %s160
                  %p157 = scmp.ge.s32.totalorder %s156, 1
                  %s161 = sphi %s132, %s132
                  %s162 = sphi %s128, %s128
                $region46: #{minibatch_stddev.2} parent=42 // loop_header_branch
                  %159 = sbr.rel (%p157) target = $region50
                $region47: #{minibatch_stddev.2} parent=42 // loop_body
                  %v163 = vld [vmem:[%s161] sm:$0xff]
                  %164 = vst [vmem:[%s162] sm:$0xff] %v163
                  %v165 = vld [vmem:[%s161 + $0x10] sm:$0xff]
                  %166 = vst [vmem:[%s162 + $0x8] sm:$0xff] %v165
                $region48: #{minibatch_stddev.2} parent=42 // loop_footer
                  %s160 = sadd.s32 1, %s156
                $region49: #{minibatch_stddev.2} parent=42 // loop_footer_branch
                  %155 = sbr.rel target = $region45
                $region50: #{minibatch_stddev.2} parent=42 // loop_exit
                  _
              $region43: #{minibatch_stddev.2} parent=27 // pred_fallthru
                _
              // Predicated region
              $region51: #{minibatch_stddev.2} parent=27 // pred_check
                _
              $region52: #{minibatch_stddev.2} parent=27 // pred_check_branch
                %168 = sbr.rel target = $region54
              $region53: #{minibatch_stddev.2} parent=27 // pred_region
                _
              $region54: #{minibatch_stddev.2} parent=27 // pred_fallthru
                _
            $region28: #{minibatch_stddev.2} parent=23 // pred_fallthru
              _
            // Predicated region
            $region29: #{minibatch_stddev.2} parent=23 // pred_check
              _
            $region30: #{minibatch_stddev.2} parent=23 // pred_check_branch
              %138 = sbr.rel target = $region32
            $region31: #{minibatch_stddev.2} parent=23 // pred_region
              %s140 = ssub.s32 256, 1
              loop: start=0, step=1, limit=1
              $region33: #{minibatch_stddev.2} parent=31 // loop_pre_header
                _
              $region34: #{minibatch_stddev.2} parent=31 // loop_header
                %s142 = sphi 0, %s146
                %p143 = scmp.ge.s32.totalorder %s142, 1
                %s147 = sphi %s132, %s132
                %s148 = sphi %s128, %s128
              $region35: #{minibatch_stddev.2} parent=31 // loop_header_branch
                %145 = sbr.rel (%p143) target = $region39
              $region36: #{minibatch_stddev.2} parent=31 // loop_body
                %v149 = vld [vmem:[%s147] sm:%s140]
                %150 = vst [vmem:[%s148] sm:%s140] %v149
                %v151 = vld [vmem:[%s147 + $0x10] sm:%s140]
                %152 = vst [vmem:[%s148 + $0x8] sm:%s140] %v151
              $region37: #{minibatch_stddev.2} parent=31 // loop_footer
                %s146 = sadd.s32 1, %s142
              $region38: #{minibatch_stddev.2} parent=31 // loop_footer_branch
                %141 = sbr.rel target = $region34
              $region39: #{minibatch_stddev.2} parent=31 // loop_exit
                _
            $region32: #{minibatch_stddev.2} parent=23 // pred_fallthru
              _
          $region24: #{minibatch_stddev.2} parent=19 // pred_fallthru
            _
          %169 = vnop
        $region20: #{minibatch_stddev.2} parent=15 // pred_fallthru
          _
      $region16: #{minibatch_stddev.2} parent=5 // pred_fallthru
        _
      %p170 = scmp.le.s32.totalorder 1, %s9
      %p171 = scmp.lt.s32.totalorder %s9, 3
      %p172 = pnand %p170, %p171
      %p173 = pneg %p172
      // Predicated region
      $region55: #{minibatch_stddev.2} parent=5 // pred_check
        _
      $region56: #{minibatch_stddev.2} parent=5 // pred_check_branch
        %175 = sbr.rel (%p172) target = $region58
      $region57: #{minibatch_stddev.2} parent=5 // pred_region
        %s176 = ssub.s32 %s9, 1
        %s177 = sand.u32 %s36, 1
        %s178 = sand.u32 %s36, 1
        %s179 = smul.addr %s178, 16
        %s180 = scalar_lea.vmem [#allocation2], %s179
        // Predicated region
        $region59: #{minibatch_stddev.2} parent=57 // pred_check
          %p181 = pneg %p49
        $region60: #{minibatch_stddev.2} parent=57 // pred_check_branch
          %183 = sbr.rel (%p181) target = $region62
        $region61: #{minibatch_stddev.2} parent=57 // pred_region
          _
        $region62: #{minibatch_stddev.2} parent=57 // pred_fallthru
          _
        %s184 = sand.u32 %s36, 1
        %s185 = sand.u32 %s36, 1
        %s186 = smul.addr %s185, 16
        %s187 = scalar_lea.vmem [#allocation2], %s186
        %p188 = pneg %p49
        %p189 = pneg %p46
        %p190 = pneg %p77
        %p191 = pneg %p74
        %s192 = sand.u32 %s64, 1
        %s193 = sand.u32 %s64, 1
        %s194 = smul.addr %s193, 16
        %s195 = scalar_lea.vmem [#allocation3], %s194
        %p196 = pneg %p103
        %p197 = pneg %p100
        %p198 = scmp.lt.s32.totalorder %s18, 1
        %s199 = scalar_select %p198, %s18, 1
        %s200 = smul.addr %s199, 2
        %s201 = scalar_lea.vmem %s2, %s200
        %s202 = sadd.s32 %s18, %s19
        %s203 = smul.u32 4, %s202
        %s204 = sadd.s32 %s18, %s19
        %s205 = smul.u32 4, %s204
        %p206 = scmp.lt.s32.totalorder %s18, 1
        %s207 = scalar_select %p206, %s18, 1
        %s208 = smul.addr %s207, 2
        %s209 = scalar_lea.vmem %s2, %s208
        %p210 = scmp.eq.s32.totalorder %s19, 0
        // Predicated region
        $region63: #{minibatch_stddev.2} parent=57 // pred_check
          %p211 = pneg %p210
        $region64: #{minibatch_stddev.2} parent=57 // pred_check_branch
          %213 = sbr.rel (%p211) target = $region66
        $region65: #{minibatch_stddev.2} parent=57 // pred_region
          %vm214 = vcmask 1024
          %215 = vst.msk [vmem:[%s209] sm:$0x3] %vm214, 0.0
        $region66: #{minibatch_stddev.2} parent=57 // pred_fallthru
          _
        %v216 = vld [vmem:[%s180] sm:$0xff]
        %v217 = vld [vmem:[%s180 + $0x8] sm:$0xff]
        %218 = vst [vmem:[%s195] sm:$0xff] %v216
        %219 = vst [vmem:[%s195 + $0x8] sm:$0xff] %v217
        %v222 = vcombine.high %v216, %v216
        %v224 = vunpack.c.l.s4 1983009808
        %v225 = vunpack.c.0.s8 %v224
        %v226 = vlaneseq
        %v227 = vshrl.u32 %v226, 7
        %v228 = vsub.s32 %v225, %v227
        %v229 = vrot.slane %v216, %v228
        %v231 = vunpack.c.l.s4 1983009808
        %v232 = vunpack.c.0.s8 %v231
        %v233 = vlaneseq
        %v234 = vshrl.u32 %v233, 7
        %v235 = vsub.s32 %v232, %v234
        %v236 = vrot.slane %v222, %v235
        %v237 = vcombine.high %v229, %v229
        %v238 = vcombine.high %v236, %v236
        %v239 = vcombine.high %v217, %v217
        %v241 = vunpack.c.l.s4 1983009808
        %v242 = vunpack.c.0.s8 %v241
        %v243 = vlaneseq
        %v244 = vshrl.u32 %v243, 7
        %v245 = vsub.s32 %v242, %v244
        %v246 = vrot.slane %v217, %v245
        %v248 = vunpack.c.l.s4 1983009808
        %v249 = vunpack.c.0.s8 %v248
        %v250 = vlaneseq
        %v251 = vshrl.u32 %v250, 7
        %v252 = vsub.s32 %v249, %v251
        %v253 = vrot.slane %v239, %v252
        %v254 = vcombine.high %v246, %v246
        %v255 = vcombine.high %v253, %v253
        %vm264 = vcmask 1041408
        %v265 = vsel %vm264, %v229, 0.0
        %v266 = vsel %vm264, %v246, 0.0
        %v267 = vadd.f32 %v265, %v266
        %v268 = vsel %vm264, %v237, 0.0
        %v269 = vsel %vm264, %v254, 0.0
        %v270 = vadd.f32 %v268, %v269
        %v271 = vsel %vm264, %v236, 0.0
        %v272 = vsel %vm264, %v253, 0.0
        %v273 = vadd.f32 %v271, %v272
        %v274 = vsel %vm264, %v238, 0.0
        %v275 = vsel %vm264, %v255, 0.0
        %v276 = vadd.f32 %v274, %v275
        %v277 = vrcp.pop 2.0
        %v278 = vmul.f32 %v267, %v277
        %v279 = vmul.f32 %v270, %v277
        %v280 = vmul.f32 %v273, %v277
        %v281 = vmul.f32 %v276, %v277
        %v286 = vcombine.low %v278, %v279
        %v287 = vcombine.low %v280, %v281
        %v289 = vunpack.c.l.s4 1983009808
        %v290 = vunpack.c.0.s8 %v289
        %v291 = vlaneseq
        %v292 = vshrl.u32 %v291, 7
        %v293 = vsub.s32 %v290, %v292
        %v294 = vrot.slane %v286, %v293
        %v296 = vunpack.c.l.s4 1983009808
        %v297 = vunpack.c.0.s8 %v296
        %v298 = vlaneseq
        %v299 = vshrl.u32 %v298, 7
        %v300 = vsub.s32 %v297, %v299
        %v301 = vrot.slane %v287, %v300
        %v302 = vcombine.low %v294, %v301
        %v304 = vsub.f32 %v216, %v302
        %v305 = vsub.f32 %v217, %v302
        %v306 = vmul.f32 %v304, %v304
        %v307 = vmul.f32 %v305, %v305
        %v310 = vcombine.high %v306, %v306
        %v312 = vunpack.c.l.s4 1983009808
        %v313 = vunpack.c.0.s8 %v312
        %v314 = vlaneseq
        %v315 = vshrl.u32 %v314, 7
        %v316 = vsub.s32 %v313, %v315
        %v317 = vrot.slane %v306, %v316
        %v319 = vunpack.c.l.s4 1983009808
        %v320 = vunpack.c.0.s8 %v319
        %v321 = vlaneseq
        %v322 = vshrl.u32 %v321, 7
        %v323 = vsub.s32 %v320, %v322
        %v324 = vrot.slane %v310, %v323
        %v325 = vcombine.high %v317, %v317
        %v326 = vcombine.high %v324, %v324
        %v327 = vcombine.high %v307, %v307
        %v329 = vunpack.c.l.s4 1983009808
        %v330 = vunpack.c.0.s8 %v329
        %v331 = vlaneseq
        %v332 = vshrl.u32 %v331, 7
        %v333 = vsub.s32 %v330, %v332
        %v334 = vrot.slane %v307, %v333
        %v336 = vunpack.c.l.s4 1983009808
        %v337 = vunpack.c.0.s8 %v336
        %v338 = vlaneseq
        %v339 = vshrl.u32 %v338, 7
        %v340 = vsub.s32 %v337, %v339
        %v341 = vrot.slane %v327, %v340
        %v342 = vcombine.high %v334, %v334
        %v343 = vcombine.high %v341, %v341
        %v352 = vsel %vm264, %v317, 0.0
        %v353 = vsel %vm264, %v334, 0.0
        %v354 = vadd.f32 %v352, %v353
        %v355 = vsel %vm264, %v325, 0.0
        %v356 = vsel %vm264, %v342, 0.0
        %v357 = vadd.f32 %v355, %v356
        %v358 = vsel %vm264, %v324, 0.0
        %v359 = vsel %vm264, %v341, 0.0
        %v360 = vadd.f32 %v358, %v359
        %v361 = vsel %vm264, %v326, 0.0
        %v362 = vsel %vm264, %v343, 0.0
        %v363 = vadd.f32 %v361, %v362
        %v364 = vmul.f32 %v354, %v277
        %v365 = vmul.f32 %v357, %v277
        %v366 = vmul.f32 %v360, %v277
        %v367 = vmul.f32 %v363, %v277
        %v368 = vadd.f32 %v364, 1e-08
        %v369 = vadd.f32 %v365, 1e-08
        %v370 = vadd.f32 %v366, 1e-08
        %v371 = vadd.f32 %v367, 1e-08
        %v372 = vrsqrt.pop %v368
        %v373 = vmul.f32 %v368, %v372
        %vm374 = vcmp.eq.f32.partialorder %v368, inf
        %v375 = vsel %vm374, %v368, %v373
        %vm376 = vcmp.eq.f32.partialorder %v368, 0.0
        %v377 = vand.u32 %v368, 2147483648
        %v378 = vsel %vm376, %v377, %v375
        %v379 = vrsqrt.pop %v369
        %v380 = vmul.f32 %v369, %v379
        %vm381 = vcmp.eq.f32.partialorder %v369, inf
        %v382 = vsel %vm381, %v369, %v380
        %vm383 = vcmp.eq.f32.partialorder %v369, 0.0
        %v384 = vand.u32 %v369, 2147483648
        %v385 = vsel %vm383, %v384, %v382
        %v386 = vrsqrt.pop %v370
        %v387 = vmul.f32 %v370, %v386
        %vm388 = vcmp.eq.f32.partialorder %v370, inf
        %v389 = vsel %vm388, %v370, %v387
        %vm390 = vcmp.eq.f32.partialorder %v370, 0.0
        %v391 = vand.u32 %v370, 2147483648
        %v392 = vsel %vm390, %v391, %v389
        %v393 = vrsqrt.pop %v371
        %v394 = vmul.f32 %v371, %v393
        %vm395 = vcmp.eq.f32.partialorder %v371, inf
        %v396 = vsel %vm395, %v371, %v394
        %vm397 = vcmp.eq.f32.partialorder %v371, 0.0
        %v398 = vand.u32 %v371, 2147483648
        %v399 = vsel %vm397, %v398, %v396
        %v400 = vld [vmem:[%s209] sm:$0x3]
        %v401 = vsel %vm264, %v378, 0.0
        %v402 = vsel %vm264, %v385, 0.0
        %v403 = vadd.f32 %v401, %v402
        %v404 = vsel %vm264, %v392, 0.0
        %v405 = vadd.f32 %v403, %v404
        %v406 = vsel %vm264, %v399, 0.0
        %v407 = vadd.f32 %v405, %v406
        %408 = vadd.xlane.f32.xlu0 %v407
        %v409 = vpop.xlane.xlu0 %408
        %v410 = vadd.f32 %v400, %v409
        %vm411 = vcmask 1024
        %412 = vst.msk [vmem:[%s209] sm:$0x3] %vm411, %v410
        %s413 = sand.u32 %s64, 1
        %s414 = sand.u32 %s64, 1
        %s415 = smul.addr %s414, 16
        %s416 = scalar_lea.vmem [#allocation3], %s415
        %p417 = scmp.lt.s32.totalorder %s18, 1
        %s418 = scalar_select %p417, %s18, 1
        %s419 = smul.addr %s418, 2
        %s420 = scalar_lea.vmem %s2, %s419
        // Predicated region
        $region67: #{minibatch_stddev.2} parent=57 // pred_check
          %p421 = pneg %p74
        $region68: #{minibatch_stddev.2} parent=57 // pred_check_branch
          %423 = sbr.rel (%p421) target = $region70
        $region69: #{minibatch_stddev.2} parent=57 // pred_region
          %s424 = sadd.s32 %s18, %s19
          %s425 = smul.u32 4, %s424
          %s426 = smul.addr %s425, 2
          %s427 = scalar_lea.vmem %s1, %s426
          // Predicated region
          $region71: #{minibatch_stddev.2} parent=69 // pred_check
            _
          $region72: #{minibatch_stddev.2} parent=69 // pred_check_branch
            %429 = sbr.rel (0) target = $region74
          $region73: #{minibatch_stddev.2} parent=69 // pred_region
            // Predicated region
            $region75: #{minibatch_stddev.2} parent=73 // pred_check
              _
            $region76: #{minibatch_stddev.2} parent=73 // pred_check_branch
              %431 = sbr.rel (0) target = $region78
            $region77: #{minibatch_stddev.2} parent=73 // pred_region
              // Predicated region
              $region90: #{minibatch_stddev.2} parent=77 // pred_check
                _
              $region91: #{minibatch_stddev.2} parent=77 // pred_check_branch
                %449 = sbr.rel (0) target = $region93
              $region92: #{minibatch_stddev.2} parent=77 // pred_region
                loop: start=0, step=1, limit=1
                $region94: #{minibatch_stddev.2} parent=92 // loop_pre_header
                  _
                $region95: #{minibatch_stddev.2} parent=92 // loop_header
                  %s451 = sphi 0, %s455
                  %p452 = scmp.ge.s32.totalorder %s451, 1
                  %s456 = sphi %s416, %s416
                  %s457 = sphi %s427, %s427
                $region96: #{minibatch_stddev.2} parent=92 // loop_header_branch
                  %454 = sbr.rel (%p452) target = $region100
                $region97: #{minibatch_stddev.2} parent=92 // loop_body
                  %v458 = vld [vmem:[%s456] sm:$0xff]
                  %459 = vst [vmem:[%s457] sm:$0xff] %v458
                  %v460 = vld [vmem:[%s456 + $0x8] sm:$0xff]
                  %461 = vst [vmem:[%s457 + $0x18] sm:$0xff] %v460
                $region98: #{minibatch_stddev.2} parent=92 // loop_footer
                  %s455 = sadd.s32 1, %s451
                $region99: #{minibatch_stddev.2} parent=92 // loop_footer_branch
                  %450 = sbr.rel target = $region95
                $region100: #{minibatch_stddev.2} parent=92 // loop_exit
                  _
              $region93: #{minibatch_stddev.2} parent=77 // pred_fallthru
                _
              // Predicated region
              $region101: #{minibatch_stddev.2} parent=77 // pred_check
                _
              $region102: #{minibatch_stddev.2} parent=77 // pred_check_branch
                %463 = sbr.rel target = $region104
              $region103: #{minibatch_stddev.2} parent=77 // pred_region
                _
              $region104: #{minibatch_stddev.2} parent=77 // pred_fallthru
                _
            $region78: #{minibatch_stddev.2} parent=73 // pred_fallthru
              _
            // Predicated region
            $region79: #{minibatch_stddev.2} parent=73 // pred_check
              _
            $region80: #{minibatch_stddev.2} parent=73 // pred_check_branch
              %433 = sbr.rel target = $region82
            $region81: #{minibatch_stddev.2} parent=73 // pred_region
              %s435 = ssub.s32 256, 1
              loop: start=0, step=1, limit=1
              $region83: #{minibatch_stddev.2} parent=81 // loop_pre_header
                _
              $region84: #{minibatch_stddev.2} parent=81 // loop_header
                %s437 = sphi 0, %s441
                %p438 = scmp.ge.s32.totalorder %s437, 1
                %s442 = sphi %s416, %s416
                %s443 = sphi %s427, %s427
              $region85: #{minibatch_stddev.2} parent=81 // loop_header_branch
                %440 = sbr.rel (%p438) target = $region89
              $region86: #{minibatch_stddev.2} parent=81 // loop_body
                %v444 = vld [vmem:[%s442] sm:%s435]
                %445 = vst [vmem:[%s443] sm:%s435] %v444
                %v446 = vld [vmem:[%s442 + $0x8] sm:%s435]
                %447 = vst [vmem:[%s443 + $0x18] sm:%s435] %v446
              $region87: #{minibatch_stddev.2} parent=81 // loop_footer
                %s441 = sadd.s32 1, %s437
              $region88: #{minibatch_stddev.2} parent=81 // loop_footer_branch
                %436 = sbr.rel target = $region84
              $region89: #{minibatch_stddev.2} parent=81 // loop_exit
                _
            $region82: #{minibatch_stddev.2} parent=73 // pred_fallthru
              _
          $region74: #{minibatch_stddev.2} parent=69 // pred_fallthru
            _
          %464 = vnop
        $region70: #{minibatch_stddev.2} parent=57 // pred_fallthru
          _
        // Predicated region
        $region105: #{minibatch_stddev.2} parent=57 // pred_check
          %p465 = pneg %p100
        $region106: #{minibatch_stddev.2} parent=57 // pred_check_branch
          %467 = sbr.rel (%p465) target = $region108
        $region107: #{minibatch_stddev.2} parent=57 // pred_region
          _
        $region108: #{minibatch_stddev.2} parent=57 // pred_fallthru
          _
      $region58: #{minibatch_stddev.2} parent=5 // pred_fallthru
        _
      %p468 = scmp.le.s32.totalorder 2, %s9
      // Predicated region
      $region109: #{minibatch_stddev.2} parent=5 // pred_check
        %p469 = pneg %p468
      $region110: #{minibatch_stddev.2} parent=5 // pred_check_branch
        %471 = sbr.rel (%p469) target = $region112
      $region111: #{minibatch_stddev.2} parent=5 // pred_region
        %s472 = ssub.s32 %s9, 2
        // Predicated region
        $region113: #{minibatch_stddev.2} parent=111 // pred_check
          %p473 = pneg %p80
        $region114: #{minibatch_stddev.2} parent=111 // pred_check_branch
          %475 = sbr.rel (%p473) target = $region116
        $region115: #{minibatch_stddev.2} parent=111 // pred_region
          %s476 = sand.u32 %s65, 1
          %s477 = sand.u32 %s65, 1
          %s478 = smul.addr %s477, 16
          %s479 = scalar_lea.vmem [#allocation3], %s478
        $region116: #{minibatch_stddev.2} parent=111 // pred_fallthru
          _
        // Predicated region
        $region117: #{minibatch_stddev.2} parent=111 // pred_check
          %p480 = pneg %p106
        $region118: #{minibatch_stddev.2} parent=111 // pred_check_branch
          %482 = sbr.rel (%p480) target = $region120
        $region119: #{minibatch_stddev.2} parent=111 // pred_region
          %p483 = scmp.lt.s32.totalorder %s20, 1
          %s484 = scalar_select %p483, %s20, 1
          %s485 = smul.addr %s484, 2
          %s486 = scalar_lea.vmem %s2, %s485
        $region120: #{minibatch_stddev.2} parent=111 // pred_fallthru
          _
      $region112: #{minibatch_stddev.2} parent=5 // pred_fallthru
        _
    $region6: #{minibatch_stddev.2} parent=1 // loop_footer
      %s13 = sadd.s32 1, %s9
    $region7: #{minibatch_stddev.2} parent=1 // loop_footer_branch
      %8 = sbr.rel target = $region3
    $region8: #{minibatch_stddev.2} parent=1 // loop_exit
      _

</llo_original>
